<compile_context>
chip_gen: v6e
topology: v6e:2x2x1
jax: 0.10.0
libtpu: 0.0.40
codegen_flags: <defaults>
</compile_context>

<pallas_src>
import functools

import jax
import jax.numpy as jnp
from jax.experimental import pallas as pl
from jax.experimental.pallas import tpu as pltpu


def _round_up(n, m):
    return ((n + m - 1) // m) * m


def _vmem_capacity_bytes():
    """Best-effort per-core VMEM capacity (used only for tile-size selection)."""
    try:
        info = pltpu.get_tpu_info()
        cap = getattr(info, "vmem_capacity_bytes", None)
        if cap:
            return int(cap)
    except Exception:
        pass
    try:
        kind = jax.devices()[0].device_kind.lower()
        if "v7" in kind:
            return 64 * 1024 * 1024
    except Exception:
        pass
    return 128 * 1024 * 1024


# ---------------------------------------------------------------------------
# Kernels
# ---------------------------------------------------------------------------
def _mlp_resident_kernel(x_ref, w_fc_ref, w_proj_ref, o_ref):
    # x_ref:      (tm, D)    token tile
    # w_fc_ref:   (D,  Hp)   full c_fc^T  (transposed, H-padded), VMEM-resident
    # w_proj_ref: (Hp, D)    full c_proj^T (transposed, H-padded), VMEM-resident
    # o_ref:      (tm, D)    output tile
    h = jnp.dot(x_ref[...], w_fc_ref[...], preferred_element_type=jnp.float32)
    h = jnp.maximum(h, 0.0).astype(w_proj_ref.dtype)
    h = h * h                                                   # relu(x).square()
    o_ref[...] = jnp.dot(
        h, w_proj_ref[...], preferred_element_type=jnp.float32
    ).astype(o_ref.dtype)


def _mlp_tiled_kernel(x_ref, w_fc_ref, w_proj_ref, o_ref, acc_ref):
    # Hidden dim tiled on grid axis 1 ("arbitrary"); fp32 accumulator in VMEM.
    # x_ref: (tm, D); w_fc_ref: (D, th); w_proj_ref: (th, D); o/acc: (tm, D)
    h_idx = pl.program_id(1)

    @pl.when(h_idx == 0)
    def _():
        acc_ref[...] = jnp.zeros_like(acc_ref)

    h = jnp.dot(x_ref[...], w_fc_ref[...], preferred_element_type=jnp.float32)
    h = jnp.maximum(h, 0.0).astype(w_proj_ref.dtype)
    h = h * h
    acc_ref[...] += jnp.dot(h, w_proj_ref[...], preferred_element_type=jnp.float32)

    @pl.when(h_idx == pl.num_programs(1) - 1)
    def _():
        o_ref[...] = acc_ref[...].astype(o_ref.dtype)


# ---------------------------------------------------------------------------
# Wrapper
# ---------------------------------------------------------------------------
@functools.partial(jax.jit, static_argnames=("force_tiled",))
def mlp_pallas(x, w_fc, w_proj, *, force_tiled=False):
    """x: [B, T, D]; w_fc: [H, D] (PyTorch layout); w_proj: [D, H] (PyTorch layout)."""
    B, T, D = x.shape
    H, D2 = w_fc.shape
    assert D2 == D and w_proj.shape == (D, H)

    N = B * T
    x2d = x.reshape(N, D)

    x_b = x.dtype.itemsize
    w_b = max(w_fc.dtype.itemsize, w_proj.dtype.itemsize)
    o_b = x_b
    align = 16 if x_b < 4 else 8          # bf16 sublane packing

    vmem_cap = _vmem_capacity_bytes()
    budget = int(vmem_cap * 0.70)          # headroom for compiler scratch
    vmem_limit = int(vmem_cap * 0.85)

    # ---- path / tile selection (all static Python at trace time) ----------
    th = 256                               # fills the 256-wide v6e/v7x MXU
    hp_res = _round_up(H, 128)
    hp_tiled = _round_up(H, th)

    def res_vmem(tm):
        return (2 * tm * D * x_b + 2 * tm * D * o_b       # x / out double-buffers
                + 2 * 2 * hp_res * D * w_b                # both weights, 2 bufs each
                + tm * hp_res * 6)                        # (tm, Hp) intermediate headroom

    def tiled_vmem(tm):
        return (2 * tm * D * x_b + 2 * tm * D * o_b
                + 2 * 2 * th * D * w_b                    # two (th, D)-sized slabs, 2 bufs
                + tm * D * 4                              # fp32 accumulator
                + tm * th * 6)                            # intermediate headroom

    tm_candidates = (1024, 768, 512, 384, 256, 128)
    resident = False
    tm_sel = 128
    if not force_tiled:
        for tm in tm_candidates:
            if res_vmem(tm) <= budget:
                resident, tm_sel = True, tm
                break
    if not resident:
        tm_sel = 128
        for tm in tm_candidates:
            if tiled_vmem(tm) <= budget:
                tm_sel = tm
                break

    tm_eff = min(tm_sel, _round_up(N, align))
    n_pad = _round_up(N, tm_eff)
    if n_pad != N:
        # Zero rows produce zero outputs through relu^2 + matmul; sliced off below.
        x2d = jnp.pad(x2d, ((0, n_pad - N), (0, 0)))

    h_pad = hp_res if resident else hp_tiled
    # One-time transposes (+ zero padding of H): both in-kernel dots become plain
    # (M,K)x(K,N) contractions. Padded hidden units contribute exactly zero.
    w_fc_t = w_fc.T                                        # (D, H)
    w_proj_t = w_proj.T                                    # (H, D)
    if h_pad != H:
        w_fc_t = jnp.pad(w_fc_t, ((0, 0), (0, h_pad - H)))
        w_proj_t = jnp.pad(w_proj_t, ((0, h_pad - H), (0, 0)))

    cost = pl.CostEstimate(
        flops=4 * n_pad * h_pad * D,
        transcendentals=0,
        bytes_accessed=(n_pad * D * (x_b + o_b) + 2 * h_pad * D * w_b),
    )

    n_tiles = n_pad // tm_eff

    if resident:
        out2d = pl.pallas_call(
            _mlp_resident_kernel,
            out_shape=jax.ShapeDtypeStruct((n_pad, D), x.dtype),
            grid_spec=pltpu.PrefetchScalarGridSpec(
                num_scalar_prefetch=0,
                grid=(n_tiles,),
                in_specs=[
                    pl.BlockSpec((tm_eff, D), lambda i: (i, 0)),     # x tile
                    pl.BlockSpec((D, h_pad), lambda i: (0, 0)),      # full c_fc^T (resident)
                    pl.BlockSpec((h_pad, D), lambda i: (0, 0)),      # full c_proj^T (resident)
                ],
                out_specs=pl.BlockSpec((tm_eff, D), lambda i: (i, 0)),
            ),
            compiler_params=pltpu.CompilerParams(
                dimension_semantics=("parallel",),
                vmem_limit_bytes=vmem_limit,
            ),
            cost_estimate=cost,
        )(x2d, w_fc_t, w_proj_t)
    else:
        grid = (n_tiles, h_pad // th)
        out2d = pl.pallas_call(
            _mlp_tiled_kernel,
            out_shape=jax.ShapeDtypeStruct((n_pad, D), x.dtype),
            grid_spec=pltpu.PrefetchScalarGridSpec(
                num_scalar_prefetch=0,
                grid=grid,
                in_specs=[
                    pl.BlockSpec((tm_eff, D), lambda i, h: (i, 0)),  # x tile
                    pl.BlockSpec((D, th), lambda i, h: (0, h)),      # c_fc^T slab
                    pl.BlockSpec((th, D), lambda i, h: (h, 0)),      # c_proj^T slab
                ],
                out_specs=pl.BlockSpec((tm_eff, D), lambda i, h: (i, 0)),
                scratch_shapes=[pltpu.VMEM((tm_eff, D), jnp.float32)],
            ),
            compiler_params=pltpu.CompilerParams(
                dimension_semantics=("parallel", "arbitrary"),
                vmem_limit_bytes=vmem_limit,
            ),
            cost_estimate=cost,
        )(x2d, w_fc_t, w_proj_t)

    return out2d[:N].reshape(B, T, D)


def mlp_reference(x, w_fc, w_proj):
    hp = jax.lax.Precision.HIGHEST
    xf = x.astype(jnp.float32)
    h = jnp.einsum("btd,hd->bth", xf, w_fc.astype(jnp.float32), precision=hp)
    h = jnp.square(jnp.maximum(h, 0.0))
    return jnp.einsum("bth,dh->btd", h, w_proj.astype(jnp.float32), precision=hp)


# TODO(synk): only the MLP block of GPT is kernelized here; the RWKV7 recurrence
# (RUN_CUDA_RWKV7g), GroupNorm/LayerNorm, embedding and lm_head remain in XLA.

if __name__ == "__main__":
    key = jax.random.PRNGKey(0)

    # --- test 1: shapes consistent with the module (n_embd=32 -> H = 7*32//2 = 112)
    B, T, D = 2, 8, 32
    H = 7 * D // 2
    kx, kfc, kproj, key = jax.random.split(key, 4)
    x = jax.random.normal(kx, (B, T, D), dtype=jnp.float32)
    # NOTE: the original module zero-inits c_proj.weight; random values here so
    # the kernel output is non-trivial (forward semantics unchanged).
    w_fc = jax.random.normal(kfc, (H, D), dtype=jnp.float32) * 0.02
    w_proj = jax.random.normal(kproj, (D, H), dtype=jnp.float32) * 0.02

    out = mlp_pallas(x, w_fc, w_proj)
    jax.block_until_ready(out)
    ref = mlp_reference(x, w_fc, w_proj)
    assert out.shape == (B, T, D)
    assert jnp.allclose(out, ref, atol=1e-4, rtol=1e-3)

    # --- test 2: token padding (N not a multiple of 8) + resident-weight path
    B2, T2, D2 = 2, 13, 256
    H2 = 7 * D2 // 2  # 896
    kx2, kfc2, kproj2, key = jax.random.split(key, 4)
    x2 = jax.random.normal(kx2, (B2, T2, D2), dtype=jnp.float32)
    w_fc2 = jax.random.normal(kfc2, (H2, D2), dtype=jnp.float32) * 0.02
    w_proj2 = jax.random.normal(kproj2, (D2, H2), dtype=jnp.float32) * 0.02

    out2 = mlp_pallas(x2, w_fc2, w_proj2)
    jax.block_until_ready(out2)
    ref2 = mlp_reference(x2, w_fc2, w_proj2)
    assert out2.shape == (B2, T2, D2)
    assert jnp.allclose(out2, ref2, atol=2e-4, rtol=2e-3)

    # --- test 3: force the H-tiled accumulator path (H padded 896 -> 1024, th=256)
    out3 = mlp_pallas(x2, w_fc2, w_proj2, force_tiled=True)
    jax.block_until_ready(out3)
    assert jnp.allclose(out3, ref2, atol=2e-4, rtol=2e-3)

    # --- test 4: bf16 inputs/weights (production dtype path, 16-row alignment)
    B4, T4, D4 = 2, 24, 128
    H4 = 7 * D4 // 2  # 448 -> padded to 512
    kx4, kfc4, kproj4, key = jax.random.split(key, 4)
    x4 = jax.random.normal(kx4, (B4, T4, D4), dtype=jnp.float32).astype(jnp.bfloat16)
    w_fc4 = (jax.random.normal(kfc4, (H4, D4), dtype=jnp.float32) * 0.02).astype(jnp.bfloat16)
    w_proj4 = (jax.random.normal(kproj4, (D4, H4), dtype=jnp.float32) * 0.02).astype(jnp.bfloat16)

    out4 = mlp_pallas(x4, w_fc4, w_proj4)
    jax.block_until_ready(out4)
    ref4 = mlp_reference(x4, w_fc4, w_proj4)
    assert out4.shape == (B4, T4, D4)
    assert jnp.allclose(out4.astype(jnp.float32), ref4, atol=4e-3, rtol=5e-2)

    print("KERNEL_OK")
</pallas_src>

<mosaic_0001>
module attributes {stable_mosaic.version = 11 : i64} {
  func.func @_mlp_resident_kernel(%arg0: i32, %arg1: memref<16x32xf32, #tpu.memory_space<vmem>>, %arg2: memref<32x128xf32, #tpu.memory_space<vmem>>, %arg3: memref<128x32xf32, #tpu.memory_space<vmem>>, %arg4: memref<16x32xf32, #tpu.memory_space<vmem>>) attributes {dimension_semantics = [#tpu.dimension_semantics<parallel>], iteration_bounds = array<i64: 1>, scalar_prefetch = 0 : i64, scratch_operands = 0 : i64, tpu.core_type = #tpu.core_type<tc>, window_params = [{transform_indices = @transform_0, window_bounds = array<i64: 16, 32>}, {pipeline_mode = #tpu.pipeline_mode<synchronous>, transform_indices = @transform_1, window_bounds = array<i64: 32, 128>}, {pipeline_mode = #tpu.pipeline_mode<synchronous>, transform_indices = @transform_2, window_bounds = array<i64: 128, 32>}, {transform_indices = @transform_3, window_bounds = array<i64: 16, 32>}]} {
    %c0 = arith.constant 0 : index
    %c0_0 = arith.constant 0 : index
    %0 = vector.load %arg1[%c0, %c0_0] : memref<16x32xf32, #tpu.memory_space<vmem>>, vector<16x32xf32>
    %c0_1 = arith.constant 0 : index
    %c0_2 = arith.constant 0 : index
    %1 = vector.load %arg2[%c0_1, %c0_2] : memref<32x128xf32, #tpu.memory_space<vmem>>, vector<32x128xf32>
    %cst = arith.constant dense<0.000000e+00> : vector<16x128xf32>
    %2 = tpu.matmul %0, %1, %cst {dimension_numbers = #tpu.dot_dimension_numbers<[1], [0], [0], [1], [0, 0, 1, 1], [], []>} : vector<16x32xf32>, vector<32x128xf32>, vector<16x128xf32> -> vector<16x128xf32>
    %cst_3 = arith.constant 0.000000e+00 : f32
    %3 = vector.broadcast %cst_3 : f32 to vector<16x128xf32>
    %4 = arith.maximumf %2, %3 : vector<16x128xf32>
    %5 = arith.mulf %4, %4 : vector<16x128xf32>
    %c0_4 = arith.constant 0 : index
    %c0_5 = arith.constant 0 : index
    %6 = vector.load %arg3[%c0_4, %c0_5] : memref<128x32xf32, #tpu.memory_space<vmem>>, vector<128x32xf32>
    %cst_6 = arith.constant dense<0.000000e+00> : vector<16x32xf32>
    %7 = tpu.matmul %5, %6, %cst_6 {dimension_numbers = #tpu.dot_dimension_numbers<[1], [0], [0], [1], [0, 0, 1, 1], [], []>} : vector<16x128xf32>, vector<128x32xf32>, vector<16x32xf32> -> vector<16x32xf32>
    %c0_7 = arith.constant 0 : index
    %c0_8 = arith.constant 0 : index
    %8 = vector.load %arg4[%c0_7, %c0_8] : memref<16x32xf32, #tpu.memory_space<vmem>>, vector<16x32xf32>
    tpu.vector_store %arg4[%c0_7, %c0_8], %7 {strides = array<i32>} : memref<16x32xf32, #tpu.memory_space<vmem>>, vector<16x32xf32>,
    return
  }
  func.func @transform_0(%arg0: i32) -> (i32, i32) {
    %c0_i32 = arith.constant 0 : i32
    %c0_i32_0 = arith.constant 0 : i32
    return %arg0, %c0_i32 : i32, i32
  }
  func.func @transform_1(%arg0: i32) -> (i32, i32) {
    %c0_i32 = arith.constant 0 : i32
    %c0_i32_0 = arith.constant 0 : i32
    %c0_i32_1 = arith.constant 0 : i32
    return %c0_i32, %c0_i32_0 : i32, i32
  }
  func.func @transform_2(%arg0: i32) -> (i32, i32) {
    %c0_i32 = arith.constant 0 : i32
    %c0_i32_0 = arith.constant 0 : i32
    %c0_i32_1 = arith.constant 0 : i32
    return %c0_i32, %c0_i32_0 : i32, i32
  }
  func.func @transform_3(%arg0: i32) -> (i32, i32) {
    %c0_i32 = arith.constant 0 : i32
    %c0_i32_0 = arith.constant 0 : i32
    return %arg0, %c0_i32 : i32, i32
  }
}

</mosaic_0001>

<llo_original>
// kernel: mlp_pallas.1
$region0: #{mlp_pallas.1}
  #allocation0 [shape = 'u32[]', space=smem, size = 0x4, offset = 0x4, fixed_abs, tag = 'smem constant byte address 0x4 - core index']
  #allocation1 [shape = 'u32[144,128]{1,0:T(1,128)}', space=vmem, size = 0x12000, scoped, tag = 'internal scratch']
  %s0 = inlined_call_operand.vmem [shape: f32[16,32], index: 0, kind: input, shape index: {}]
  %s1 = inlined_call_operand.vmem [shape: f32[32,128], index: 1, kind: input, shape index: {}]
  %s2 = inlined_call_operand.vmem [shape: f32[128,32], index: 2, kind: input, shape index: {}]
  %s3 = inlined_call_operand.hbm [shape: f32[16,32], index: 3, kind: output, shape index: {}]
  %s4 = sld [smem:[#allocation0]]
  $region22: #{mlp_pallas.1} parent=0
    _
  %s6 = ssub.s32 1, %s4
  %s7 = scalar_select 0, %s6, %s4
  $region1: #{mlp_pallas.1} parent=0
    #allocation2 [shape = 'u8[8192]{0}', space=vmem, size = 0x2000, scoped, tag = 'output window, operand 0, single buffered']
    #allocation3 [shape = 's32[1]{0}', space=sflag, size = 0x4, scoped, tag = 'scoped memory for mlp_pallas.1']
    %8 = vsyncpa [#allocation3], 0
    // Predicated region
    $region2: #{mlp_pallas.1} parent=1 // pred_check
      _
    $region3: #{mlp_pallas.1} parent=1 // pred_check_branch
      %10 = sbr.rel (0) target = $region5
    $region4: #{mlp_pallas.1} parent=1 // pred_region
      _
    $region5: #{mlp_pallas.1} parent=1 // pred_fallthru
      _
    // Predicated region
    $region6: #{mlp_pallas.1} parent=1 // pred_check
      _
    $region7: #{mlp_pallas.1} parent=1 // pred_check_branch
      %12 = sbr.rel (0) target = $region9
    $region8: #{mlp_pallas.1} parent=1 // pred_region
      _
    $region9: #{mlp_pallas.1} parent=1 // pred_fallthru
      _
    // Predicated region
    $region10: #{mlp_pallas.1} parent=1 // pred_check
      _
    $region11: #{mlp_pallas.1} parent=1 // pred_check_branch
      %14 = sbr.rel (0) target = $region13
    $region12: #{mlp_pallas.1} parent=1 // pred_region
      _
    $region13: #{mlp_pallas.1} parent=1 // pred_fallthru
      _
    %v15 = vld [vmem:[%s0] sm:$0xff]
    %v16 = vld [vmem:[%s0 + $0x8] sm:$0xff]
    %v17 = vld [vmem:[%s1] sm:$0xff]
    %v18 = vld [vmem:[%s1 + $0x8] sm:$0xff]
    %v19 = vld [vmem:[%s1 + $0x10] sm:$0xff]
    %v20 = vld [vmem:[%s1 + $0x18] sm:$0xff]
    %vm21 = vcmask 261120
    %v23 = vsel %vm21, %v15, 0
    %v26 = vsel %vm21, %v16, 0
    %28 = vmatprep.subr.mxu0 0.0
    %29 = vmatpush1.msra.mxu0 0.0
    %30 = vmatprep.subr.mxu0 0.0
    %31 = vmatpush1.msra.mxu0 0.0
    %32 = vmatprep.subr.mxu0 0.0
    %33 = vmatpush1.msra.mxu0 0.0
    %34 = vmatprep.subr.mxu0 0.0
    %35 = vmatpush1.msra.mxu0 0.0
    %36 = vmatprep.subr.mxu0 0.0
    %37 = vmatpush1.msra.mxu0 0.0
    %38 = vmatprep.subr.mxu0 0.0
    %39 = vmatpush1.msra.mxu0 0.0
    %40 = vmatprep.subr.mxu0 0.0
    %41 = vmatpush1.msra.mxu0 0.0
    %42 = vmatprep.subr.mxu0 0.0
    %43 = vmatpush1.msra.mxu0 0.0
    %44 = vmatprep.subr.mxu0 0.0
    %45 = vmatpush1.msra.mxu0 0.0
    %46 = vmatprep.subr.mxu0 0.0
    %47 = vmatpush1.msra.mxu0 0.0
    %48 = vmatprep.subr.mxu0 0.0
    %49 = vmatpush1.msra.mxu0 0.0
    %50 = vmatprep.subr.mxu0 0.0
    %51 = vmatpush1.msra.mxu0 0.0
    %52 = vmatprep.subr.mxu0 0.0
    %53 = vmatpush1.msra.mxu0 %v20
    %54 = vmatprep.subr.mxu0 0.0
    %55 = vmatpush1.msra.mxu0 %v19
    %56 = vmatprep.subr.mxu0 0.0
    %57 = vmatpush1.msra.mxu0 %v18
    %58 = vmatprep.subr.mxu0 0.0
    %59 = vmatpush1.msra.mxu0 %v17
    %60 = vmatprep.subr.mxu0 0.0
    %61 = vmatpush2.msra.mxu0 0.0
    %62 = vmatprep.subr.mxu0 0.0
    %63 = vmatpush2.msra.mxu0 0.0
    %64 = vmatprep.subr.mxu0 0.0
    %65 = vmatpush2.msra.mxu0 0.0
    %66 = vmatprep.subr.mxu0 0.0
    %67 = vmatpush2.msra.mxu0 0.0
    %68 = vmatprep.subr.mxu0 0.0
    %69 = vmatpush2.msra.mxu0 0.0
    %70 = vmatprep.subr.mxu0 0.0
    %71 = vmatpush2.msra.mxu0 0.0
    %72 = vmatprep.subr.mxu0 0.0
    %73 = vmatpush2.msra.mxu0 0.0
    %74 = vmatprep.subr.mxu0 0.0
    %75 = vmatpush2.msra.mxu0 0.0
    %76 = vmatprep.subr.mxu0 0.0
    %77 = vmatpush2.msra.mxu0 0.0
    %78 = vmatprep.subr.mxu0 0.0
    %79 = vmatpush2.msra.mxu0 0.0
    %80 = vmatprep.subr.mxu0 0.0
    %81 = vmatpush2.msra.mxu0 0.0
    %82 = vmatprep.subr.mxu0 0.0
    %83 = vmatpush2.msra.mxu0 0.0
    %84 = vmatprep.subr.mxu0 0.0
    %85 = vmatpush2.msra.mxu0 0.0
    %86 = vmatprep.subr.mxu0 0.0
    %87 = vmatpush2.msra.mxu0 0.0
    %88 = vmatprep.subr.mxu0 0.0
    %89 = vmatpush2.msra.mxu0 0.0
    %90 = vmatprep.subr.mxu0 0.0
    %91 = vmatpush2.msra.mxu0 0.0
    %92 = vmatprep.mubr.f32.mxu0 0.0
    %93 = vmatmul.mubr.f32.gmra.mxu0 %v23
    %v94 = vpop.f32.mrf.mxu0
    %v95 = vadd.f32 0.0, %v94
    %v96 = vpop.f32.mrf.mxu0
    %97 = vmatprep.mubr.f32.mxu0 0.0
    %98 = vmatmul.mubr.f32.gmra.mxu0 %v26
    %v99 = vpop.f32.mrf.mxu0
    %v100 = vadd.f32 0.0, %v99
    %v101 = vpop.f32.mrf.mxu0
    %102 = vdwg.mxu0
    %v103 = vmax.f32 %v95, 0.0
    %v104 = vmax.f32 %v100, 0.0
    %v105 = vmul.f32 %v103, %v103
    %v106 = vmul.f32 %v104, %v104
    %v107 = vld [vmem:[%s2] sm:$0xff]
    %v108 = vld [vmem:[%s2 + $0x8] sm:$0xff]
    %v109 = vld [vmem:[%s2 + $0x10] sm:$0xff]
    %v110 = vld [vmem:[%s2 + $0x18] sm:$0xff]
    %v111 = vld [vmem:[%s2 + $0x20] sm:$0xff]
    %v112 = vld [vmem:[%s2 + $0x28] sm:$0xff]
    %v113 = vld [vmem:[%s2 + $0x30] sm:$0xff]
    %v114 = vld [vmem:[%s2 + $0x38] sm:$0xff]
    %v115 = vld [vmem:[%s2 + $0x40] sm:$0xff]
    %v116 = vld [vmem:[%s2 + $0x48] sm:$0xff]
    %v117 = vld [vmem:[%s2 + $0x50] sm:$0xff]
    %v118 = vld [vmem:[%s2 + $0x58] sm:$0xff]
    %v119 = vld [vmem:[%s2 + $0x60] sm:$0xff]
    %v120 = vld [vmem:[%s2 + $0x68] sm:$0xff]
    %v121 = vld [vmem:[%s2 + $0x70] sm:$0xff]
    %v122 = vld [vmem:[%s2 + $0x78] sm:$0xff]
    %123 = vmatprep.subr.mxu0 0.0
    %124 = vmatpush1.msra.mxu0 %v122
    %125 = vmatprep.subr.mxu0 0.0
    %126 = vmatpush1.msra.mxu0 %v121
    %127 = vmatprep.subr.mxu0 0.0
    %128 = vmatpush1.msra.mxu0 %v120
    %129 = vmatprep.subr.mxu0 0.0
    %130 = vmatpush1.msra.mxu0 %v119
    %131 = vmatprep.subr.mxu0 0.0
    %132 = vmatpush1.msra.mxu0 %v118
    %133 = vmatprep.subr.mxu0 0.0
    %134 = vmatpush1.msra.mxu0 %v117
    %135 = vmatprep.subr.mxu0 0.0
    %136 = vmatpush1.msra.mxu0 %v116
    %137 = vmatprep.subr.mxu0 0.0
    %138 = vmatpush1.msra.mxu0 %v115
    %139 = vmatprep.subr.mxu0 0.0
    %140 = vmatpush1.msra.mxu0 %v114
    %141 = vmatprep.subr.mxu0 0.0
    %142 = vmatpush1.msra.mxu0 %v113
    %143 = vmatprep.subr.mxu0 0.0
    %144 = vmatpush1.msra.mxu0 %v112
    %145 = vmatprep.subr.mxu0 0.0
    %146 = vmatpush1.msra.mxu0 %v111
    %147 = vmatprep.subr.mxu0 0.0
    %148 = vmatpush1.msra.mxu0 %v110
    %149 = vmatprep.subr.mxu0 0.0
    %150 = vmatpush1.msra.mxu0 %v109
    %151 = vmatprep.subr.mxu0 0.0
    %152 = vmatpush1.msra.mxu0 %v108
    %153 = vmatprep.subr.mxu0 0.0
    %154 = vmatpush1.msra.mxu0 %v107
    %155 = vmatprep.subr.mxu0 0.0
    %156 = vmatpush2.msra.mxu0 0.0
    %157 = vmatprep.subr.mxu0 0.0
    %158 = vmatpush2.msra.mxu0 0.0
    %159 = vmatprep.subr.mxu0 0.0
    %160 = vmatpush2.msra.mxu0 0.0
    %161 = vmatprep.subr.mxu0 0.0
    %162 = vmatpush2.msra.mxu0 0.0
    %163 = vmatprep.subr.mxu0 0.0
    %164 = vmatpush2.msra.mxu0 0.0
    %165 = vmatprep.subr.mxu0 0.0
    %166 = vmatpush2.msra.mxu0 0.0
    %167 = vmatprep.subr.mxu0 0.0
    %168 = vmatpush2.msra.mxu0 0.0
    %169 = vmatprep.subr.mxu0 0.0
    %170 = vmatpush2.msra.mxu0 0.0
    %171 = vmatprep.subr.mxu0 0.0
    %172 = vmatpush2.msra.mxu0 0.0
    %173 = vmatprep.subr.mxu0 0.0
    %174 = vmatpush2.msra.mxu0 0.0
    %175 = vmatprep.subr.mxu0 0.0
    %176 = vmatpush2.msra.mxu0 0.0
    %177 = vmatprep.subr.mxu0 0.0
    %178 = vmatpush2.msra.mxu0 0.0
    %179 = vmatprep.subr.mxu0 0.0
    %180 = vmatpush2.msra.mxu0 0.0
    %181 = vmatprep.subr.mxu0 0.0
    %182 = vmatpush2.msra.mxu0 0.0
    %183 = vmatprep.subr.mxu0 0.0
    %184 = vmatpush2.msra.mxu0 0.0
    %185 = vmatprep.subr.mxu0 0.0
    %186 = vmatpush2.msra.mxu0 0.0
    %187 = vmatprep.mubr.f32.mxu0 0.0
    %188 = vmatmul.mubr.f32.gmra.mxu0 %v105
    %v189 = vpop.f32.mrf.mxu0
    %v190 = vadd.f32 0.0, %v189
    %v191 = vpop.f32.mrf.mxu0
    %192 = vmatprep.mubr.f32.mxu0 0.0
    %193 = vmatmul.mubr.f32.gmra.mxu0 %v106
    %v194 = vpop.f32.mrf.mxu0
    %v195 = vadd.f32 0.0, %v194
    %v196 = vpop.f32.mrf.mxu0
    %197 = vdwg.mxu0
    %198 = vst.msk [vmem:[#allocation2] sm:$0xff] %vm21, %v190
    %199 = vst.msk [vmem:[#allocation2 + $0x8] sm:$0xff] %vm21, %v195
    // Predicated region
    $region14: #{mlp_pallas.1} parent=1 // pred_check
      _
    $region15: #{mlp_pallas.1} parent=1 // pred_check_branch
      %201 = sbr.rel (0) target = $region17
    $region16: #{mlp_pallas.1} parent=1 // pred_region
      %s203 = ssub.s32 256, 256
      %204 = vsyncadd [#allocation3], %s203
      %s205 = sshll.u32 [#allocation2], 4
      %s206 = int_to_ptr.vmem [resolvable:$true] %s205
      %211 = dma.vmem_to_hbm [thread:$0]  %s206, 256, %s3, [#allocation3], 128, 128, 8
    $region17: #{mlp_pallas.1} parent=1 // pred_fallthru
      _
    // Predicated region
    $region18: #{mlp_pallas.1} parent=1 // pred_check
      _
    $region19: #{mlp_pallas.1} parent=1 // pred_check_branch
      %213 = sbr.rel (0) target = $region21
    $region20: #{mlp_pallas.1} parent=1 // pred_region
      %214 = dma.done [#allocation3], 256
    $region21: #{mlp_pallas.1} parent=1 // pred_fallthru
      _
    %215 = vsyncpa [#allocation3], 1

</llo_original>
